<compile_context>
chip_gen: v5e
topology: v5e:2x2
jax: 0.10.0
libtpu: 0.0.40
codegen_flags: <defaults>
</compile_context>

<pallas_src>
import jax
import jax.numpy as jnp
from jax.experimental import pallas as pl
from jax.experimental.pallas import tpu as pltpu


def _pad_to(x, m):
    return ((x + m - 1) // m) * m


def _make_plane_kernel(H, W):
    """Path A kernel: one grid step pools `bp` whole planes.

    x_ref: (bp, H*W)   -- each row is a full plane, row-major (h, w)
    o_ref: (bp, Ho*Wo) -- each row is a full pooled plane, row-major (i, j)
    """
    Ho, Wo = H // 2, W // 2

    def kernel(x_ref, o_ref):
        bp = x_ref.shape[0]
        # Transposed rows are ordered (i, di, j, dj): r = 2W*i + W*di + 2j + dj.
        xt = x_ref[...].T                              # (H*W, bp)
        x3 = xt.reshape(Ho, 2 * W, bp)                 # axis1 = W*di + (2j+dj)
        h = jnp.maximum(x3[:, :W, :], x3[:, W:, :])    # max over di -> (Ho, W, bp)
        h3 = h.reshape(Ho * Wo, 2, bp)                 # leading = (i, j), axis1 = dj
        w = jnp.maximum(h3[:, 0, :], h3[:, 1, :])      # max over dj -> (Ho*Wo, bp)
        o_ref[...] = w.T.astype(o_ref.dtype)           # (bp, Ho*Wo)

    return kernel


def _make_rows_kernel(W):
    """Path B kernel: one grid step pools `tr` merged H row-pairs.

    x_ref: (tr, 2W) -- row (p, i) holds plane p rows 2i and 2i+1 back to back
    o_ref: (tr, Wo)
    """
    Wo = W // 2

    def kernel(x_ref, o_ref):
        tr = x_ref.shape[0]
        xr = x_ref[...]                                # (tr, 2W)
        h = jnp.maximum(xr[:, :W], xr[:, W:])          # max over di -> (tr, W)
        ht = h.T                                       # (W, tr): rows = (j, dj)
        h3 = ht.reshape(Wo, 2, tr)                     # leading = j, axis1 = dj
        w = jnp.maximum(h3[:, 0, :], h3[:, 1, :])      # max over dj -> (Wo, tr)
        o_ref[...] = w.T.astype(o_ref.dtype)           # (tr, Wo)

    return kernel


def maxpool2x2(x):
    """x: (N, C, H, W) with even H, W. Returns (N, C, H//2, W//2)."""
    N, C, H, W = x.shape
    assert H % 2 == 0 and W % 2 == 0, "MaxPool2d(2): H and W must be even"
    # TODO(synk): PyTorch MaxPool2d floors odd spatial dims; only even H/W here.
    Ho, Wo = H // 2, W // 2
    NC = N * C
    HW, HoWo = H * W, Ho * Wo
    isz = x.dtype.itemsize
    sub = 8 * max(1, 4 // isz)            # sublane tile height for this dtype

    # ---- generation-aware scoped-VMEM budget --------------------------------
    try:
        phys_vmem = int(pltpu.get_tpu_info().vmem_capacity_bytes)
    except Exception:
        phys_vmem = 64 * 1024 * 1024      # v7x per-core VMEM (tightest case)
    vmem_limit = min(int(phys_vmem * 0.6), 96 * 1024 * 1024)
    cap = int(vmem_limit * 0.8)           # headroom for Mosaic internal scratch

    cost = pl.CostEstimate(
        flops=3 * NC * HoWo,                         # 3 compares per output
        transcendentals=0,
        bytes_accessed=(NC * HW + NC * HoWo) * isz,  # read 1x, write 0.25x
    )
    cparams = pltpu.CompilerParams(
        dimension_semantics=("parallel",),
        vmem_limit_bytes=vmem_limit,
    )

    # ---- Path A footprint model & block pick --------------------------------
    def plane_vmem_bytes(bp):
        lanes_t = _pad_to(bp, 128)        # lane width of transposed temporaries
        blk_in = _pad_to(bp, sub) * _pad_to(HW, 128) * isz
        blk_out = _pad_to(bp, sub) * _pad_to(HoWo, 128) * isz
        temps = (_pad_to(HW, sub) * lanes_t                  # x.T
                 + Ho * _pad_to(2 * W, sub) * lanes_t        # (Ho, 2W, bp) regroup
                 + 3 * Ho * _pad_to(W, sub) * lanes_t        # di slices + h
                 + HoWo * sub * lanes_t                      # (Ho*Wo, 2, bp) regroup
                 + 3 * _pad_to(HoWo, sub) * lanes_t) * isz   # dj slices + w
        return 2 * (blk_in + blk_out) + blk_out + temps

    def pick_planes_per_block():
        if NC < sub:
            bp = NC                        # block dim == full array dim is legal
            return bp if plane_vmem_bytes(bp) <= cap else None
        bp = (NC // sub) * sub
        if NC >= 4 * sub:
            # >= 4 grid steps so a 2-TensorCore chip gets >= 2 steps per core.
            bp = min(bp, max(sub, (pl.cdiv(NC, 4) // sub) * sub))
        while bp > sub and plane_vmem_bytes(bp) > cap:
            bp = max(sub, (bp // 2 // sub) * sub)
        return bp if plane_vmem_bytes(bp) <= cap else None

    # ---- Path B footprint model & block pick --------------------------------
    def rows_vmem_bytes(tr):
        lanes_t = _pad_to(tr, 128)
        blk_in = _pad_to(tr, sub) * _pad_to(2 * W, 128) * isz
        blk_out = _pad_to(tr, sub) * _pad_to(Wo, 128) * isz
        temps = (blk_in                                           # loaded block
                 + 3 * _pad_to(tr, sub) * _pad_to(W, 128) * isz   # di slices + h
                 + _pad_to(W, sub) * lanes_t * isz                # h.T
                 + Wo * sub * lanes_t * isz                       # (Wo, 2, tr) regroup
                 + 3 * _pad_to(Wo, sub) * lanes_t * isz           # dj slices + w
                 + blk_out)                                       # final transpose
        return 2 * (blk_in + blk_out) + temps

    def pick_rows_per_block(total_rows):
        if total_rows < sub:
            return total_rows
        tr = (total_rows // sub) * sub
        if total_rows >= 4 * sub:
            tr = min(tr, max(sub, (pl.cdiv(total_rows, 4) // sub) * sub))
        while tr > sub and rows_vmem_bytes(tr) > cap:
            tr = max(sub, (tr // 2 // sub) * sub)
        # TODO(synk): a single padded row wider than the budget (absurdly large
        # W) could still exceed the scoped-VMEM limit; W is not tiled here.
        return tr

    bp = pick_planes_per_block()
    if bp is not None:
        # ---- Path A: whole planes on the lane axis --------------------------
        x_in = x.reshape(NC, HW)                      # free row-major reshape
        out = pl.pallas_call(
            _make_plane_kernel(H, W),
            out_shape=jax.ShapeDtypeStruct((NC, HoWo), x.dtype),
            grid_spec=pltpu.PrefetchScalarGridSpec(
                num_scalar_prefetch=0,
                grid=(pl.cdiv(NC, bp),),
                # Last dims equal the full array dims; leading dim is a
                # multiple of 8 (or the full dim), satisfying (8,128) rules.
                in_specs=[pl.BlockSpec((bp, HW), lambda i: (i, 0))],
                out_specs=pl.BlockSpec((bp, HoWo), lambda i: (i, 0)),
            ),
            compiler_params=cparams,
            cost_estimate=cost,
        )(x_in)
        return out.reshape(N, C, Ho, Wo)

    # ---- Path B: tile merged H row-pairs (large planes) ----------------------
    total_rows = NC * Ho
    tr = pick_rows_per_block(total_rows)
    x_in = x.reshape(total_rows, 2 * W)               # free row-major reshape
    out = pl.pallas_call(
        _make_rows_kernel(W),
        out_shape=jax.ShapeDtypeStruct((total_rows, Wo), x.dtype),
        grid_spec=pltpu.PrefetchScalarGridSpec(
            num_scalar_prefetch=0,
            grid=(pl.cdiv(total_rows, tr),),
            in_specs=[pl.BlockSpec((tr, 2 * W), lambda i: (i, 0))],
            out_specs=pl.BlockSpec((tr, Wo), lambda i: (i, 0)),
        ),
        compiler_params=cparams,
        cost_estimate=cost,
    )(x_in)
    return out.reshape(N, C, Ho, Wo)


if __name__ == "__main__":
    key = jax.random.PRNGKey(0)
    # Small shapes consistent with the module: batch=2, channels=4, spatial=16.
    x = jax.random.normal(key, (2, 4, 16, 16), dtype=jnp.float32)

    out = maxpool2x2(x)
    jax.block_until_ready(out)

    # Reference in plain JAX (same semantics as nn.MaxPool2d(2)).
    ref = jnp.max(x.reshape(2, 4, 8, 2, 8, 2), axis=(3, 5))
    assert out.shape == (2, 4, 8, 8)
    assert jnp.allclose(out, ref)

    print("KERNEL_OK")
</pallas_src>

<mosaic_0001>
module attributes {stable_mosaic.version = 11 : i64} {
  func.func @kernel(%arg0: i32, %arg1: memref<8x256xf32, #tpu.memory_space<vmem>>, %arg2: memref<8x64xf32, #tpu.memory_space<vmem>>) attributes {dimension_semantics = [#tpu.dimension_semantics<parallel>], iteration_bounds = array<i64: 1>, scalar_prefetch = 0 : i64, scratch_operands = 0 : i64, tpu.core_type = #tpu.core_type<tc>, window_params = [{transform_indices = @transform_0, window_bounds = array<i64: 8, 256>}, {transform_indices = @transform_1, window_bounds = array<i64: 8, 64>}]} {
    %c0 = arith.constant 0 : index
    %c0_0 = arith.constant 0 : index
    %0 = vector.load %arg1[%c0, %c0_0] : memref<8x256xf32, #tpu.memory_space<vmem>>, vector<8x256xf32>
    %1 = tpu.transpose %0, [1, 0] : vector<8x256xf32> -> vector<256x8xf32>
    %2 = vector.shape_cast %1 : vector<256x8xf32> to vector<8x32x8xf32>
    %3 = vector.extract_strided_slice %2 {offsets = [0, 0, 0], sizes = [8, 16, 8], strides = [1, 1, 1]} : vector<8x32x8xf32> to vector<8x16x8xf32>
    %4 = vector.extract_strided_slice %2 {offsets = [0, 16, 0], sizes = [8, 16, 8], strides = [1, 1, 1]} : vector<8x32x8xf32> to vector<8x16x8xf32>
    %5 = arith.maximumf %3, %4 : vector<8x16x8xf32>
    %6 = vector.shape_cast %5 : vector<8x16x8xf32> to vector<64x2x8xf32>
    %7 = vector.extract_strided_slice %6 {offsets = [0, 0, 0], sizes = [64, 1, 8], strides = [1, 1, 1]} : vector<64x2x8xf32> to vector<64x1x8xf32>
    %8 = vector.shape_cast %7 : vector<64x1x8xf32> to vector<64x8xf32>
    %9 = vector.extract_strided_slice %6 {offsets = [0, 1, 0], sizes = [64, 1, 8], strides = [1, 1, 1]} : vector<64x2x8xf32> to vector<64x1x8xf32>
    %10 = vector.shape_cast %9 : vector<64x1x8xf32> to vector<64x8xf32>
    %11 = arith.maximumf %8, %10 : vector<64x8xf32>
    %12 = tpu.transpose %11, [1, 0] : vector<64x8xf32> -> vector<8x64xf32>
    %c0_1 = arith.constant 0 : index
    %c0_2 = arith.constant 0 : index
    %13 = vector.load %arg2[%c0_1, %c0_2] : memref<8x64xf32, #tpu.memory_space<vmem>>, vector<8x64xf32>
    tpu.vector_store %arg2[%c0_1, %c0_2], %12 {strides = array<i32>} : memref<8x64xf32, #tpu.memory_space<vmem>>, vector<8x64xf32>,
    return
  }
  func.func @transform_0(%arg0: i32) -> (i32, i32) {
    %c0_i32 = arith.constant 0 : i32
    %c0_i32_0 = arith.constant 0 : i32
    return %arg0, %c0_i32 : i32, i32
  }
  func.func @transform_1(%arg0: i32) -> (i32, i32) {
    %c0_i32 = arith.constant 0 : i32
    %c0_i32_0 = arith.constant 0 : i32
    return %arg0, %c0_i32 : i32, i32
  }
}

</mosaic_0001>

<llo_original>
// kernel: tpu_custom_call.1
$region0: #{tpu_custom_call.1}
  #allocation0 [shape = 'u32[]', space=smem, size = 0x4, offset = 0x4, fixed_abs, tag = 'smem constant byte address 0x4 - core index']
  #allocation1 [shape = 'u32[72,128]{1,0:T(1,128)}', space=vmem, size = 0x9000, scoped, tag = 'internal scratch']
  %s0 = inlined_call_operand.hbm [shape: f32[8,256], index: 0, kind: input, shape index: {}]
  %s1 = inlined_call_operand.hbm [shape: f32[8,64], index: 1, kind: output, shape index: {}]
  %s2 = sld [smem:[#allocation0]]
  $region18: #{tpu_custom_call.1} parent=0
    _
  %s4 = ssub.s32 1, %s2
  %s5 = scalar_select 0, %s4, %s2
  $region1: #{tpu_custom_call.1} parent=0
    #allocation2 [shape = 'u8[8192]{0}', space=vmem, size = 0x2000, scoped, tag = 'input window, operand 0, single buffered']
    #allocation3 [shape = 's32[1]{0}', space=sflag, size = 0x4, scoped, tag = 'scoped memory for tpu_custom_call.1']
    #allocation4 [shape = 's32[1]{0}', space=sflag, size = 0x4, scoped, tag = 'scoped memory for tpu_custom_call.1']
    #allocation5 [shape = 'u8[4096]{0}', space=vmem, size = 0x1000, scoped, tag = 'output window, operand 0, single buffered']
    %6 = vsyncpa [#allocation3], 0
    %7 = vsyncpa [#allocation4], 0
    // Predicated region
    $region2: #{tpu_custom_call.1} parent=1 // pred_check
      _
    $region3: #{tpu_custom_call.1} parent=1 // pred_check_branch
      %9 = sbr.rel (0) target = $region5
    $region4: #{tpu_custom_call.1} parent=1 // pred_region
      %11 = vsyncadd [#allocation3], 0
      %s13 = sshll.u32 %s0, 4
      %s14 = int_to_ptr.hbm [resolvable:$true] %s13
      %s15 = sshll.u32 [#allocation2], 4
      %s16 = int_to_ptr.vmem [resolvable:$true] %s15
      %18 = dma.hbm_to_vmem [thread:$0]  %s14, 256, %s16, [#allocation3]
    $region5: #{tpu_custom_call.1} parent=1 // pred_fallthru
      _
    // Predicated region
    $region6: #{tpu_custom_call.1} parent=1 // pred_check
      _
    $region7: #{tpu_custom_call.1} parent=1 // pred_check_branch
      %20 = sbr.rel (0) target = $region9
    $region8: #{tpu_custom_call.1} parent=1 // pred_region
      %22 = dma.done [#allocation3], 256
    $region9: #{tpu_custom_call.1} parent=1 // pred_fallthru
      _
    %v23 = vld [vmem:[#allocation2] sm:$0xff]
    %v24 = vld [vmem:[#allocation2 + $0x8] sm:$0xff]
    %25 = vxpose.xlu0.b32.start [1/16] %v23, 128
    %26 = vxpose.xlu0.b32.cont [2/16] 0.0, 128
    %27 = vxpose.xlu0.b32.cont [3/16] 0.0, 128
    %28 = vxpose.xlu0.b32.cont [4/16] 0.0, 128
    %29 = vxpose.xlu0.b32.cont [5/16] 0.0, 128
    %30 = vxpose.xlu0.b32.cont [6/16] 0.0, 128
    %31 = vxpose.xlu0.b32.cont [7/16] 0.0, 128
    %32 = vxpose.xlu0.b32.cont [8/16] 0.0, 128
    %33 = vxpose.xlu0.b32.cont [9/16] 0.0, 128
    %34 = vxpose.xlu0.b32.cont [10/16] 0.0, 128
    %35 = vxpose.xlu0.b32.cont [11/16] 0.0, 128
    %36 = vxpose.xlu0.b32.cont [12/16] 0.0, 128
    %37 = vxpose.xlu0.b32.cont [13/16] 0.0, 128
    %38 = vxpose.xlu0.b32.cont [14/16] 0.0, 128
    %39 = vxpose.xlu0.b32.cont [15/16] 0.0, 128
    %40 = vxpose.xlu0.b32.end [16/16] 0.0, 128
    %v41 = vpop.trf.xlu0
    %v42 = vpop.trf.xlu0
    %v43 = vpop.trf.xlu0
    %v44 = vpop.trf.xlu0
    %v45 = vpop.trf.xlu0
    %v46 = vpop.trf.xlu0
    %v47 = vpop.trf.xlu0
    %v48 = vpop.trf.xlu0
    %v49 = vpop.trf.xlu0
    %v50 = vpop.trf.xlu0
    %v51 = vpop.trf.xlu0
    %v52 = vpop.trf.xlu0
    %v53 = vpop.trf.xlu0
    %v54 = vpop.trf.xlu0
    %v55 = vpop.trf.xlu0
    %v56 = vpop.trf.xlu0
    %57 = vxpose.xlu0.b32.start [1/16] %v24, 128
    %58 = vxpose.xlu0.b32.cont [2/16] 0.0, 128
    %59 = vxpose.xlu0.b32.cont [3/16] 0.0, 128
    %60 = vxpose.xlu0.b32.cont [4/16] 0.0, 128
    %61 = vxpose.xlu0.b32.cont [5/16] 0.0, 128
    %62 = vxpose.xlu0.b32.cont [6/16] 0.0, 128
    %63 = vxpose.xlu0.b32.cont [7/16] 0.0, 128
    %64 = vxpose.xlu0.b32.cont [8/16] 0.0, 128
    %65 = vxpose.xlu0.b32.cont [9/16] 0.0, 128
    %66 = vxpose.xlu0.b32.cont [10/16] 0.0, 128
    %67 = vxpose.xlu0.b32.cont [11/16] 0.0, 128
    %68 = vxpose.xlu0.b32.cont [12/16] 0.0, 128
    %69 = vxpose.xlu0.b32.cont [13/16] 0.0, 128
    %70 = vxpose.xlu0.b32.cont [14/16] 0.0, 128
    %71 = vxpose.xlu0.b32.cont [15/16] 0.0, 128
    %72 = vxpose.xlu0.b32.end [16/16] 0.0, 128
    %v73 = vpop.trf.xlu0
    %v74 = vpop.trf.xlu0
    %v75 = vpop.trf.xlu0
    %v76 = vpop.trf.xlu0
    %v77 = vpop.trf.xlu0
    %v78 = vpop.trf.xlu0
    %v79 = vpop.trf.xlu0
    %v80 = vpop.trf.xlu0
    %v81 = vpop.trf.xlu0
    %v82 = vpop.trf.xlu0
    %v83 = vpop.trf.xlu0
    %v84 = vpop.trf.xlu0
    %v85 = vpop.trf.xlu0
    %v86 = vpop.trf.xlu0
    %v87 = vpop.trf.xlu0
    %v88 = vpop.trf.xlu0
    %v89 = vmax.f32 %v41, %v43
    %v90 = vmax.f32 %v42, %v44
    %v91 = vmax.f32 %v45, %v47
    %v92 = vmax.f32 %v46, %v48
    %v93 = vmax.f32 %v49, %v51
    %v94 = vmax.f32 %v50, %v52
    %v95 = vmax.f32 %v53, %v55
    %v96 = vmax.f32 %v54, %v56
    %v97 = vmax.f32 %v73, %v75
    %v98 = vmax.f32 %v74, %v76
    %v99 = vmax.f32 %v77, %v79
    %v100 = vmax.f32 %v78, %v80
    %v101 = vmax.f32 %v81, %v83
    %v102 = vmax.f32 %v82, %v84
    %v103 = vmax.f32 %v85, %v87
    %v104 = vmax.f32 %v86, %v88
    %v121 = vrot.slane %v89, 2
    %v122 = vrot.slane %v89, 4
    %v123 = vrot.slane %v89, 6
    %v124 = vrot.slane %v90, 2
    %v125 = vrot.slane %v90, 4
    %v126 = vrot.slane %v90, 6
    %v127 = vrot.slane %v91, 2
    %v128 = vrot.slane %v91, 4
    %v129 = vrot.slane %v91, 6
    %v130 = vrot.slane %v92, 2
    %v131 = vrot.slane %v92, 4
    %v132 = vrot.slane %v92, 6
    %v133 = vrot.slane %v93, 2
    %v134 = vrot.slane %v93, 4
    %v135 = vrot.slane %v93, 6
    %v136 = vrot.slane %v94, 2
    %v137 = vrot.slane %v94, 4
    %v138 = vrot.slane %v94, 6
    %v139 = vrot.slane %v95, 2
    %v140 = vrot.slane %v95, 4
    %v141 = vrot.slane %v95, 6
    %v142 = vrot.slane %v96, 2
    %v143 = vrot.slane %v96, 4
    %v144 = vrot.slane %v96, 6
    %v145 = vrot.slane %v97, 2
    %v146 = vrot.slane %v97, 4
    %v147 = vrot.slane %v97, 6
    %v148 = vrot.slane %v98, 2
    %v149 = vrot.slane %v98, 4
    %v150 = vrot.slane %v98, 6
    %v151 = vrot.slane %v99, 2
    %v152 = vrot.slane %v99, 4
    %v153 = vrot.slane %v99, 6
    %v154 = vrot.slane %v100, 2
    %v155 = vrot.slane %v100, 4
    %v156 = vrot.slane %v100, 6
    %v157 = vrot.slane %v101, 2
    %v158 = vrot.slane %v101, 4
    %v159 = vrot.slane %v101, 6
    %v160 = vrot.slane %v102, 2
    %v161 = vrot.slane %v102, 4
    %v162 = vrot.slane %v102, 6
    %v163 = vrot.slane %v103, 2
    %v164 = vrot.slane %v103, 4
    %v165 = vrot.slane %v103, 6
    %v166 = vrot.slane %v104, 2
    %v167 = vrot.slane %v104, 4
    %v168 = vrot.slane %v104, 6
    %v217 = vrot.slane %v89, 7
    %v218 = vrot.slane %v217, 2
    %v219 = vrot.slane %v121, 7
    %v220 = vrot.slane %v219, 2
    %v221 = vrot.slane %v122, 7
    %v222 = vrot.slane %v221, 2
    %v223 = vrot.slane %v123, 7
    %v224 = vrot.slane %v223, 2
    %v225 = vrot.slane %v90, 7
    %v226 = vrot.slane %v225, 2
    %v227 = vrot.slane %v124, 7
    %v228 = vrot.slane %v227, 2
    %v229 = vrot.slane %v125, 7
    %v230 = vrot.slane %v229, 2
    %v231 = vrot.slane %v126, 7
    %v232 = vrot.slane %v231, 2
    %v233 = vrot.slane %v91, 7
    %v234 = vrot.slane %v233, 2
    %v235 = vrot.slane %v127, 7
    %v236 = vrot.slane %v235, 2
    %v237 = vrot.slane %v128, 7
    %v238 = vrot.slane %v237, 2
    %v239 = vrot.slane %v129, 7
    %v240 = vrot.slane %v239, 2
    %v241 = vrot.slane %v92, 7
    %v242 = vrot.slane %v241, 2
    %v243 = vrot.slane %v130, 7
    %v244 = vrot.slane %v243, 2
    %v245 = vrot.slane %v131, 7
    %v246 = vrot.slane %v245, 2
    %v247 = vrot.slane %v132, 7
    %v248 = vrot.slane %v247, 2
    %v249 = vrot.slane %v93, 7
    %v250 = vrot.slane %v249, 2
    %v251 = vrot.slane %v133, 7
    %v252 = vrot.slane %v251, 2
    %v253 = vrot.slane %v134, 7
    %v254 = vrot.slane %v253, 2
    %v255 = vrot.slane %v135, 7
    %v256 = vrot.slane %v255, 2
    %v257 = vrot.slane %v94, 7
    %v258 = vrot.slane %v257, 2
    %v259 = vrot.slane %v136, 7
    %v260 = vrot.slane %v259, 2
    %v261 = vrot.slane %v137, 7
    %v262 = vrot.slane %v261, 2
    %v263 = vrot.slane %v138, 7
    %v264 = vrot.slane %v263, 2
    %v265 = vrot.slane %v95, 7
    %v266 = vrot.slane %v265, 2
    %v267 = vrot.slane %v139, 7
    %v268 = vrot.slane %v267, 2
    %v269 = vrot.slane %v140, 7
    %v270 = vrot.slane %v269, 2
    %v271 = vrot.slane %v141, 7
    %v272 = vrot.slane %v271, 2
    %v273 = vrot.slane %v96, 7
    %v274 = vrot.slane %v273, 2
    %v275 = vrot.slane %v142, 7
    %v276 = vrot.slane %v275, 2
    %v277 = vrot.slane %v143, 7
    %v278 = vrot.slane %v277, 2
    %v279 = vrot.slane %v144, 7
    %v280 = vrot.slane %v279, 2
    %v281 = vrot.slane %v97, 7
    %v282 = vrot.slane %v281, 2
    %v283 = vrot.slane %v145, 7
    %v284 = vrot.slane %v283, 2
    %v285 = vrot.slane %v146, 7
    %v286 = vrot.slane %v285, 2
    %v287 = vrot.slane %v147, 7
    %v288 = vrot.slane %v287, 2
    %v289 = vrot.slane %v98, 7
    %v290 = vrot.slane %v289, 2
    %v291 = vrot.slane %v148, 7
    %v292 = vrot.slane %v291, 2
    %v293 = vrot.slane %v149, 7
    %v294 = vrot.slane %v293, 2
    %v295 = vrot.slane %v150, 7
    %v296 = vrot.slane %v295, 2
    %v297 = vrot.slane %v99, 7
    %v298 = vrot.slane %v297, 2
    %v299 = vrot.slane %v151, 7
    %v300 = vrot.slane %v299, 2
    %v301 = vrot.slane %v152, 7
    %v302 = vrot.slane %v301, 2
    %v303 = vrot.slane %v153, 7
    %v304 = vrot.slane %v303, 2
    %v305 = vrot.slane %v100, 7
    %v306 = vrot.slane %v305, 2
    %v307 = vrot.slane %v154, 7
    %v308 = vrot.slane %v307, 2
    %v309 = vrot.slane %v155, 7
    %v310 = vrot.slane %v309, 2
    %v311 = vrot.slane %v156, 7
    %v312 = vrot.slane %v311, 2
    %v313 = vrot.slane %v101, 7
    %v314 = vrot.slane %v313, 2
    %v315 = vrot.slane %v157, 7
    %v316 = vrot.slane %v315, 2
    %v317 = vrot.slane %v158, 7
    %v318 = vrot.slane %v317, 2
    %v319 = vrot.slane %v159, 7
    %v320 = vrot.slane %v319, 2
    %v321 = vrot.slane %v102, 7
    %v322 = vrot.slane %v321, 2
    %v323 = vrot.slane %v160, 7
    %v324 = vrot.slane %v323, 2
    %v325 = vrot.slane %v161, 7
    %v326 = vrot.slane %v325, 2
    %v327 = vrot.slane %v162, 7
    %v328 = vrot.slane %v327, 2
    %v329 = vrot.slane %v103, 7
    %v330 = vrot.slane %v329, 2
    %v331 = vrot.slane %v163, 7
    %v332 = vrot.slane %v331, 2
    %v333 = vrot.slane %v164, 7
    %v334 = vrot.slane %v333, 2
    %v335 = vrot.slane %v165, 7
    %v336 = vrot.slane %v335, 2
    %v337 = vrot.slane %v104, 7
    %v338 = vrot.slane %v337, 2
    %v339 = vrot.slane %v166, 7
    %v340 = vrot.slane %v339, 2
    %v341 = vrot.slane %v167, 7
    %v342 = vrot.slane %v341, 2
    %v343 = vrot.slane %v168, 7
    %v344 = vrot.slane %v343, 2
    %v409 = vmax.f32 %v89, %v218
    %v410 = vmax.f32 %v121, %v220
    %v411 = vmax.f32 %v122, %v222
    %v412 = vmax.f32 %v123, %v224
    %v413 = vmax.f32 %v90, %v226
    %v414 = vmax.f32 %v124, %v228
    %v415 = vmax.f32 %v125, %v230
    %v416 = vmax.f32 %v126, %v232
    %v417 = vmax.f32 %v91, %v234
    %v418 = vmax.f32 %v127, %v236
    %v419 = vmax.f32 %v128, %v238
    %v420 = vmax.f32 %v129, %v240
    %v421 = vmax.f32 %v92, %v242
    %v422 = vmax.f32 %v130, %v244
    %v423 = vmax.f32 %v131, %v246
    %v424 = vmax.f32 %v132, %v248
    %v425 = vmax.f32 %v93, %v250
    %v426 = vmax.f32 %v133, %v252
    %v427 = vmax.f32 %v134, %v254
    %v428 = vmax.f32 %v135, %v256
    %v429 = vmax.f32 %v94, %v258
    %v430 = vmax.f32 %v136, %v260
    %v431 = vmax.f32 %v137, %v262
    %v432 = vmax.f32 %v138, %v264
    %v433 = vmax.f32 %v95, %v266
    %v434 = vmax.f32 %v139, %v268
    %v435 = vmax.f32 %v140, %v270
    %v436 = vmax.f32 %v141, %v272
    %v437 = vmax.f32 %v96, %v274
    %v438 = vmax.f32 %v142, %v276
    %v439 = vmax.f32 %v143, %v278
    %v440 = vmax.f32 %v144, %v280
    %v441 = vmax.f32 %v97, %v282
    %v442 = vmax.f32 %v145, %v284
    %v443 = vmax.f32 %v146, %v286
    %v444 = vmax.f32 %v147, %v288
    %v445 = vmax.f32 %v98, %v290
    %v446 = vmax.f32 %v148, %v292
    %v447 = vmax.f32 %v149, %v294
    %v448 = vmax.f32 %v150, %v296
    %v449 = vmax.f32 %v99, %v298
    %v450 = vmax.f32 %v151, %v300
    %v451 = vmax.f32 %v152, %v302
    %v452 = vmax.f32 %v153, %v304
    %v453 = vmax.f32 %v100, %v306
    %v454 = vmax.f32 %v154, %v308
    %v455 = vmax.f32 %v155, %v310
    %v456 = vmax.f32 %v156, %v312
    %v457 = vmax.f32 %v101, %v314
    %v458 = vmax.f32 %v157, %v316
    %v459 = vmax.f32 %v158, %v318
    %v460 = vmax.f32 %v159, %v320
    %v461 = vmax.f32 %v102, %v322
    %v462 = vmax.f32 %v160, %v324
    %v463 = vmax.f32 %v161, %v326
    %v464 = vmax.f32 %v162, %v328
    %v465 = vmax.f32 %v103, %v330
    %v466 = vmax.f32 %v163, %v332
    %v467 = vmax.f32 %v164, %v334
    %v468 = vmax.f32 %v165, %v336
    %v469 = vmax.f32 %v104, %v338
    %v470 = vmax.f32 %v166, %v340
    %v471 = vmax.f32 %v167, %v342
    %v472 = vmax.f32 %v168, %v344
    %v537 = vperm.slane %v409, 0
    %v538 = vperm.slane %v410, 0
    %v539 = vperm.slane %v411, 0
    %v540 = vperm.slane %v412, 0
    %v541 = vperm.slane %v413, 0
    %v542 = vperm.slane %v414, 0
    %v543 = vperm.slane %v415, 0
    %v544 = vperm.slane %v416, 0
    %v545 = vperm.slane %v417, 0
    %v546 = vperm.slane %v418, 0
    %v547 = vperm.slane %v419, 0
    %v548 = vperm.slane %v420, 0
    %v549 = vperm.slane %v421, 0
    %v550 = vperm.slane %v422, 0
    %v551 = vperm.slane %v423, 0
    %v552 = vperm.slane %v424, 0
    %v553 = vperm.slane %v425, 0
    %v554 = vperm.slane %v426, 0
    %v555 = vperm.slane %v427, 0
    %v556 = vperm.slane %v428, 0
    %v557 = vperm.slane %v429, 0
    %v558 = vperm.slane %v430, 0
    %v559 = vperm.slane %v431, 0
    %v560 = vperm.slane %v432, 0
    %v561 = vperm.slane %v433, 0
    %v562 = vperm.slane %v434, 0
    %v563 = vperm.slane %v435, 0
    %v564 = vperm.slane %v436, 0
    %v565 = vperm.slane %v437, 0
    %v566 = vperm.slane %v438, 0
    %v567 = vperm.slane %v439, 0
    %v568 = vperm.slane %v440, 0
    %v569 = vperm.slane %v441, 0
    %v570 = vperm.slane %v442, 0
    %v571 = vperm.slane %v443, 0
    %v572 = vperm.slane %v444, 0
    %v573 = vperm.slane %v445, 0
    %v574 = vperm.slane %v446, 0
    %v575 = vperm.slane %v447, 0
    %v576 = vperm.slane %v448, 0
    %v577 = vperm.slane %v449, 0
    %v578 = vperm.slane %v450, 0
    %v579 = vperm.slane %v451, 0
    %v580 = vperm.slane %v452, 0
    %v581 = vperm.slane %v453, 0
    %v582 = vperm.slane %v454, 0
    %v583 = vperm.slane %v455, 0
    %v584 = vperm.slane %v456, 0
    %v585 = vperm.slane %v457, 0
    %v586 = vperm.slane %v458, 0
    %v587 = vperm.slane %v459, 0
    %v588 = vperm.slane %v460, 0
    %v589 = vperm.slane %v461, 0
    %v590 = vperm.slane %v462, 0
    %v591 = vperm.slane %v463, 0
    %v592 = vperm.slane %v464, 0
    %v593 = vperm.slane %v465, 0
    %v594 = vperm.slane %v466, 0
    %v595 = vperm.slane %v467, 0
    %v596 = vperm.slane %v468, 0
    %v597 = vperm.slane %v469, 0
    %v598 = vperm.slane %v470, 0
    %v599 = vperm.slane %v471, 0
    %v600 = vperm.slane %v472, 0
    %vm601 = vcmask 1041409
    %v602 = vsel %vm601, %v538, %v537
    %vm603 = vcmask 1042434
    %v604 = vsel %vm603, %v539, %v602
    %vm605 = vcmask 1043459
    %v606 = vsel %vm605, %v540, %v604
    %vm607 = vcmask 1044484
    %v608 = vsel %vm607, %v541, %v606
    %vm609 = vcmask 1045509
    %v610 = vsel %vm609, %v542, %v608
    %vm611 = vcmask 1046534
    %v612 = vsel %vm611, %v543, %v610
    %vm613 = vcmask 1047559
    %v614 = vsel %vm613, %v544, %v612
    %v615 = vsel %vm601, %v546, %v545
    %v616 = vsel %vm603, %v547, %v615
    %v617 = vsel %vm605, %v548, %v616
    %v618 = vsel %vm607, %v549, %v617
    %v619 = vsel %vm609, %v550, %v618
    %v620 = vsel %vm611, %v551, %v619
    %v621 = vsel %vm613, %v552, %v620
    %v622 = vsel %vm601, %v554, %v553
    %v623 = vsel %vm603, %v555, %v622
    %v624 = vsel %vm605, %v556, %v623
    %v625 = vsel %vm607, %v557, %v624
    %v626 = vsel %vm609, %v558, %v625
    %v627 = vsel %vm611, %v559, %v626
    %v628 = vsel %vm613, %v560, %v627
    %v629 = vsel %vm601, %v562, %v561
    %v630 = vsel %vm603, %v563, %v629
    %v631 = vsel %vm605, %v564, %v630
    %v632 = vsel %vm607, %v565, %v631
    %v633 = vsel %vm609, %v566, %v632
    %v634 = vsel %vm611, %v567, %v633
    %v635 = vsel %vm613, %v568, %v634
    %v636 = vsel %vm601, %v570, %v569
    %v637 = vsel %vm603, %v571, %v636
    %v638 = vsel %vm605, %v572, %v637
    %v639 = vsel %vm607, %v573, %v638
    %v640 = vsel %vm609, %v574, %v639
    %v641 = vsel %vm611, %v575, %v640
    %v642 = vsel %vm613, %v576, %v641
    %v643 = vsel %vm601, %v578, %v577
    %v644 = vsel %vm603, %v579, %v643
    %v645 = vsel %vm605, %v580, %v644
    %v646 = vsel %vm607, %v581, %v645
    %v647 = vsel %vm609, %v582, %v646
    %v648 = vsel %vm611, %v583, %v647
    %v649 = vsel %vm613, %v584, %v648
    %v650 = vsel %vm601, %v586, %v585
    %v651 = vsel %vm603, %v587, %v650
    %v652 = vsel %vm605, %v588, %v651
    %v653 = vsel %vm607, %v589, %v652
    %v654 = vsel %vm609, %v590, %v653
    %v655 = vsel %vm611, %v591, %v654
    %v656 = vsel %vm613, %v592, %v655
    %v657 = vsel %vm601, %v594, %v593
    %v658 = vsel %vm603, %v595, %v657
    %v659 = vsel %vm605, %v596, %v658
    %v660 = vsel %vm607, %v597, %v659
    %v661 = vsel %vm609, %v598, %v660
    %v662 = vsel %vm611, %v599, %v661
    %v663 = vsel %vm613, %v600, %v662
    %672 = vxpose.xlu0.b32.start [1/16] %v614, 128
    %673 = vxpose.xlu0.b32.cont [2/16] %v621, 128
    %674 = vxpose.xlu0.b32.cont [3/16] %v628, 128
    %675 = vxpose.xlu0.b32.cont [4/16] %v635, 128
    %676 = vxpose.xlu0.b32.cont [5/16] %v642, 128
    %677 = vxpose.xlu0.b32.cont [6/16] %v649, 128
    %678 = vxpose.xlu0.b32.cont [7/16] %v656, 128
    %679 = vxpose.xlu0.b32.cont [8/16] %v663, 128
    %680 = vxpose.xlu0.b32.cont [9/16] 0.0, 128
    %681 = vxpose.xlu0.b32.cont [10/16] 0.0, 128
    %682 = vxpose.xlu0.b32.cont [11/16] 0.0, 128
    %683 = vxpose.xlu0.b32.cont [12/16] 0.0, 128
    %684 = vxpose.xlu0.b32.cont [13/16] 0.0, 128
    %685 = vxpose.xlu0.b32.cont [14/16] 0.0, 128
    %686 = vxpose.xlu0.b32.cont [15/16] 0.0, 128
    %687 = vxpose.xlu0.b32.end [16/16] 0.0, 128
    %v688 = vpop.trf.xlu0
    %v689 = vpop.trf.xlu0
    %v690 = vpop.trf.xlu0
    %v691 = vpop.trf.xlu0
    %v692 = vpop.trf.xlu0
    %v693 = vpop.trf.xlu0
    %v694 = vpop.trf.xlu0
    %v695 = vpop.trf.xlu0
    %v696 = vpop.trf.xlu0
    %v697 = vpop.trf.xlu0
    %v698 = vpop.trf.xlu0
    %v699 = vpop.trf.xlu0
    %v700 = vpop.trf.xlu0
    %v701 = vpop.trf.xlu0
    %v702 = vpop.trf.xlu0
    %v703 = vpop.trf.xlu0
    %vm704 = vcmask 523264
    %705 = vst.msk [vmem:[#allocation5] sm:$0xff] %vm704, %v688
    // Predicated region
    $region10: #{tpu_custom_call.1} parent=1 // pred_check
      _
    $region11: #{tpu_custom_call.1} parent=1 // pred_check_branch
      %707 = sbr.rel (0) target = $region13
    $region12: #{tpu_custom_call.1} parent=1 // pred_region
      %709 = vsyncadd [#allocation4], 0
      %s711 = sshll.u32 [#allocation5], 4
      %s712 = int_to_ptr.vmem [resolvable:$true] %s711
      %s713 = sshll.u32 %s1, 4
      %s714 = int_to_ptr.hbm [resolvable:$true] %s713
      %716 = dma.vmem_to_hbm [thread:$0]  %s712, 128, %s714, [#allocation4]
    $region13: #{tpu_custom_call.1} parent=1 // pred_fallthru
      _
    // Predicated region
    $region14: #{tpu_custom_call.1} parent=1 // pred_check
      _
    $region15: #{tpu_custom_call.1} parent=1 // pred_check_branch
      %718 = sbr.rel (0) target = $region17
    $region16: #{tpu_custom_call.1} parent=1 // pred_region
      %720 = dma.done [#allocation4], 128
    $region17: #{tpu_custom_call.1} parent=1 // pred_fallthru
      _
    %721 = vsyncpa [#allocation3], 1
    %722 = vsyncpa [#allocation4], 1

</llo_original>
